<compile_context>
chip_gen: v5e
topology: v5e:2x2
jax: 0.10.0
libtpu: 0.0.40
codegen_flags: <defaults>
</compile_context>

<pallas_src>
import functools

import jax
import jax.numpy as jnp
from jax.experimental import pallas as pl
from jax.experimental.pallas import tpu as pltpu

EPS = 1e-5

# Conservative budgets: in-flight (double-buffered) tiles must fit well inside
# v7x's 64 MiB physical VMEM; scoped limit left with headroom.
IN_FLIGHT_BUDGET_BYTES = 24 * 1024 * 1024
VMEM_LIMIT_BYTES = 48 * 1024 * 1024


def _largest_divisor_tile(total, base, cap):
    """Largest multiple of `base` that divides `total` and is <= cap.

    Falls back to `total` (full-extent block, always legal) when no such tile
    exists (e.g. total < base or total not a multiple of base)."""
    if total <= base or total % base != 0:
        return total
    cap = int(max(base, min(cap, total)))
    t = (cap // base) * base
    while t >= base:
        if total % t == 0:
            return t
        t -= base
    return total


# ---------------------------------------------------------------------------
# Single-pass kernel: whole batch (N) resident per feature stripe.
# ---------------------------------------------------------------------------
def _bn_single_pass_kernel(x_ref, gamma_ref, beta_ref, o_ref):
    x = x_ref[...].astype(jnp.float32)
    inv_n = jnp.float32(1.0 / x.shape[0])
    # Fused single sweep: sum and sum-of-squares together (var = E[x^2] - mean^2,
    # accumulated in f32).
    s = jnp.sum(x, axis=0, keepdims=True)
    ss = jnp.sum(x * x, axis=0, keepdims=True)
    mean = s * inv_n
    var = ss * inv_n - mean * mean
    inv_std = jax.lax.rsqrt(jnp.maximum(var, 0.0) + EPS)
    # Fold gamma into the scale; one mul + one add on the (N, TILE_D) tile.
    scale = gamma_ref[...] * inv_std
    shift = beta_ref[...] - mean * scale
    o_ref[...] = (x * scale + shift).astype(o_ref.dtype)


# ---------------------------------------------------------------------------
# Two-pass path for large N: stats (accumulator) pass + apply pass.
# ---------------------------------------------------------------------------
def _bn_stats_kernel(x_ref, gamma_ref, beta_ref, scale_ref, shift_ref,
                     sum_ref, sumsq_ref, *, n_total):
    k = pl.program_id(1)  # N (reduction) axis, last & "arbitrary"

    @pl.when(k == 0)
    def _():
        sum_ref[...] = jnp.zeros_like(sum_ref)
        sumsq_ref[...] = jnp.zeros_like(sumsq_ref)

    x = x_ref[...].astype(jnp.float32)
    sum_ref[...] += jnp.sum(x, axis=0, keepdims=True)
    sumsq_ref[...] += jnp.sum(x * x, axis=0, keepdims=True)

    @pl.when(k == pl.num_programs(1) - 1)
    def _():
        inv_n = jnp.float32(1.0 / n_total)
        mean = sum_ref[...] * inv_n
        var = sumsq_ref[...] * inv_n - mean * mean
        inv_std = jax.lax.rsqrt(jnp.maximum(var, 0.0) + EPS)
        scale = gamma_ref[...] * inv_std
        scale_ref[...] = scale
        shift_ref[...] = beta_ref[...] - mean * scale


def _bn_apply_kernel(x_ref, scale_ref, shift_ref, o_ref):
    x = x_ref[...].astype(jnp.float32)
    o_ref[...] = (x * scale_ref[...] + shift_ref[...]).astype(o_ref.dtype)


# ---------------------------------------------------------------------------
# Wrapper
# ---------------------------------------------------------------------------
def normalize_batchnorm1d(x, gamma, beta, *, force_two_pass=False, max_tile_n=None):
    """BatchNorm1d (training-mode batch statistics) over axis 0 of a (N, D) array."""
    n, d = x.shape
    itemsize = jnp.dtype(x.dtype).itemsize
    gamma2 = jnp.asarray(gamma, jnp.float32).reshape(1, d)
    beta2 = jnp.asarray(beta, jnp.float32).reshape(1, d)

    # In-flight estimate for a column stripe: 2x input buf + 2x output buf.
    single_pass_ok = (4 * n * min(d, 128) * itemsize) <= IN_FLIGHT_BUDGET_BYTES

    if single_pass_ok and not force_two_pass:
        max_tile_d = max(1, IN_FLIGHT_BUDGET_BYTES // (4 * n * itemsize))
        tile_d = _largest_divisor_tile(d, 128, max_tile_d)
        grid = (d // tile_d,)
        return pl.pallas_call(
            _bn_single_pass_kernel,
            out_shape=jax.ShapeDtypeStruct((n, d), x.dtype),
            grid=grid,
            in_specs=[
                pl.BlockSpec((n, tile_d), lambda j: (0, j)),
                pl.BlockSpec((1, tile_d), lambda j: (0, j)),
                pl.BlockSpec((1, tile_d), lambda j: (0, j)),
            ],
            out_specs=pl.BlockSpec((n, tile_d), lambda j: (0, j)),
            compiler_params=pltpu.CompilerParams(
                dimension_semantics=("parallel",),
                vmem_limit_bytes=VMEM_LIMIT_BYTES,
            ),
        )(x, gamma2, beta2)

    # ---- two-pass: stats accumulation over N tiles, then normalize ----
    tile_d = _largest_divisor_tile(d, 128, 2048)
    max_n = max(8, IN_FLIGHT_BUDGET_BYTES // (4 * tile_d * itemsize))
    if max_tile_n is not None:
        max_n = min(max_n, max_tile_n)
    tile_n = _largest_divisor_tile(n, 8, max_n)
    grid = (d // tile_d, n // tile_n)

    scale, shift = pl.pallas_call(
        functools.partial(_bn_stats_kernel, n_total=float(n)),
        out_shape=(
            jax.ShapeDtypeStruct((1, d), jnp.float32),
            jax.ShapeDtypeStruct((1, d), jnp.float32),
        ),
        grid=grid,
        in_specs=[
            pl.BlockSpec((tile_n, tile_d), lambda j, k: (k, j)),
            pl.BlockSpec((1, tile_d), lambda j, k: (0, j)),
            pl.BlockSpec((1, tile_d), lambda j, k: (0, j)),
        ],
        out_specs=(
            pl.BlockSpec((1, tile_d), lambda j, k: (0, j)),
            pl.BlockSpec((1, tile_d), lambda j, k: (0, j)),
        ),
        scratch_shapes=[
            pltpu.VMEM((1, tile_d), jnp.float32),
            pltpu.VMEM((1, tile_d), jnp.float32),
        ],
        compiler_params=pltpu.CompilerParams(
            dimension_semantics=("parallel", "arbitrary"),
            vmem_limit_bytes=VMEM_LIMIT_BYTES,
        ),
    )(x, gamma2, beta2)

    return pl.pallas_call(
        _bn_apply_kernel,
        out_shape=jax.ShapeDtypeStruct((n, d), x.dtype),
        grid=grid,
        in_specs=[
            pl.BlockSpec((tile_n, tile_d), lambda j, k: (k, j)),
            pl.BlockSpec((1, tile_d), lambda j, k: (0, j)),
            pl.BlockSpec((1, tile_d), lambda j, k: (0, j)),
        ],
        out_specs=pl.BlockSpec((tile_n, tile_d), lambda j, k: (k, j)),
        compiler_params=pltpu.CompilerParams(
            dimension_semantics=("parallel", "parallel"),
            vmem_limit_bytes=VMEM_LIMIT_BYTES,
        ),
    )(x, scale, shift)


def _reference_bn(x, gamma, beta):
    mean = jnp.mean(x, axis=0, keepdims=True)
    var = jnp.mean((x - mean) ** 2, axis=0, keepdims=True)
    return (x - mean) / jnp.sqrt(var + EPS) * gamma + beta


if __name__ == "__main__":
    key = jax.random.PRNGKey(0)
    k1, k2 = jax.random.split(key)

    # Small shapes consistent with the module: batch=8, hidden (dim)=32.
    N, D = 8, 32
    x = jax.random.normal(k1, (N, D), dtype=jnp.float32)
    # PyTorch BatchNorm1d default init: weight (gamma) = 1, bias (beta) = 0.
    gamma = jnp.ones((D,), dtype=jnp.float32)
    beta = jnp.zeros((D,), dtype=jnp.float32)

    out = jax.block_until_ready(normalize_batchnorm1d(x, gamma, beta))
    ref = _reference_bn(x, gamma, beta)
    assert jnp.allclose(out, ref, atol=1e-5, rtol=1e-5)

    # Also exercise the tiled accumulator (two-pass) path at a small shape.
    N2, D2 = 64, 256
    x2 = jax.random.normal(k2, (N2, D2), dtype=jnp.float32)
    g2 = jnp.full((D2,), 1.5, dtype=jnp.float32)
    b2 = jnp.full((D2,), 0.25, dtype=jnp.float32)
    out2 = jax.block_until_ready(
        normalize_batchnorm1d(x2, g2, b2, force_two_pass=True, max_tile_n=16))
    ref2 = _reference_bn(x2, g2, b2)
    assert jnp.allclose(out2, ref2, atol=1e-4, rtol=1e-4)

    print("KERNEL_OK")
</pallas_src>

<mosaic_0001>
module attributes {stable_mosaic.version = 11 : i64} {
  func.func @_bn_single_pass_kernel(%arg0: i32, %arg1: memref<8x32xf32, #tpu.memory_space<vmem>>, %arg2: memref<1x32xf32, #tpu.memory_space<vmem>>, %arg3: memref<1x32xf32, #tpu.memory_space<vmem>>, %arg4: memref<8x32xf32, #tpu.memory_space<vmem>>) attributes {dimension_semantics = [#tpu.dimension_semantics<parallel>], iteration_bounds = array<i64: 1>, scalar_prefetch = 0 : i64, scratch_operands = 0 : i64, tpu.core_type = #tpu.core_type<tc>, window_params = [{transform_indices = @transform_0, window_bounds = array<i64: 8, 32>}, {transform_indices = @transform_1, window_bounds = array<i64: 1, 32>}, {transform_indices = @transform_2, window_bounds = array<i64: 1, 32>}, {transform_indices = @transform_3, window_bounds = array<i64: 8, 32>}]} {
    %c0 = arith.constant 0 : index
    %c0_0 = arith.constant 0 : index
    %0 = vector.load %arg1[%c0, %c0_0] : memref<8x32xf32, #tpu.memory_space<vmem>>, vector<8x32xf32>
    %cst = arith.constant dense<0.000000e+00> : vector<32xf32>
    %1 = vector.multi_reduction <add>, %0, %cst [0] : vector<8x32xf32> to vector<32xf32>
    %2 = vector.shape_cast %1 : vector<32xf32> to vector<1x32xf32>
    %3 = arith.mulf %0, %0 : vector<8x32xf32>
    %cst_1 = arith.constant dense<0.000000e+00> : vector<32xf32>
    %4 = vector.multi_reduction <add>, %3, %cst_1 [0] : vector<8x32xf32> to vector<32xf32>
    %5 = vector.shape_cast %4 : vector<32xf32> to vector<1x32xf32>
    %cst_2 = arith.constant 1.250000e-01 : f32
    %6 = vector.broadcast %cst_2 : f32 to vector<1x32xf32>
    %7 = arith.mulf %2, %6 : vector<1x32xf32>
    %cst_3 = arith.constant 1.250000e-01 : f32
    %8 = vector.broadcast %cst_3 : f32 to vector<1x32xf32>
    %9 = arith.mulf %5, %8 : vector<1x32xf32>
    %10 = arith.mulf %7, %7 : vector<1x32xf32>
    %11 = arith.subf %9, %10 : vector<1x32xf32>
    %cst_4 = arith.constant 0.000000e+00 : f32
    %12 = vector.broadcast %cst_4 : f32 to vector<1x32xf32>
    %13 = arith.maximumf %11, %12 : vector<1x32xf32>
    %cst_5 = arith.constant 9.99999974E-6 : f32
    %14 = vector.broadcast %cst_5 : f32 to vector<1x32xf32>
    %15 = arith.addf %13, %14 : vector<1x32xf32>
    %16 = math.rsqrt %15 : vector<1x32xf32>
    %c0_6 = arith.constant 0 : index
    %c0_7 = arith.constant 0 : index
    %17 = vector.load %arg2[%c0_6, %c0_7] : memref<1x32xf32, #tpu.memory_space<vmem>>, vector<1x32xf32>
    %18 = arith.mulf %17, %16 : vector<1x32xf32>
    %c0_8 = arith.constant 0 : index
    %c0_9 = arith.constant 0 : index
    %19 = vector.load %arg3[%c0_8, %c0_9] : memref<1x32xf32, #tpu.memory_space<vmem>>, vector<1x32xf32>
    %20 = arith.mulf %7, %18 : vector<1x32xf32>
    %21 = arith.subf %19, %20 : vector<1x32xf32>
    %22 = vector.broadcast %18 : vector<1x32xf32> to vector<8x32xf32>
    %23 = arith.mulf %0, %22 : vector<8x32xf32>
    %24 = vector.broadcast %21 : vector<1x32xf32> to vector<8x32xf32>
    %25 = arith.addf %23, %24 : vector<8x32xf32>
    %c0_10 = arith.constant 0 : index
    %c0_11 = arith.constant 0 : index
    %26 = vector.load %arg4[%c0_10, %c0_11] : memref<8x32xf32, #tpu.memory_space<vmem>>, vector<8x32xf32>
    tpu.vector_store %arg4[%c0_10, %c0_11], %25 {strides = array<i32>} : memref<8x32xf32, #tpu.memory_space<vmem>>, vector<8x32xf32>,
    return
  }
  func.func @transform_0(%arg0: i32) -> (i32, i32) {
    %c0_i32 = arith.constant 0 : i32
    %c0_i32_0 = arith.constant 0 : i32
    return %c0_i32, %arg0 : i32, i32
  }
  func.func @transform_1(%arg0: i32) -> (i32, i32) {
    %c0_i32 = arith.constant 0 : i32
    %c0_i32_0 = arith.constant 0 : i32
    return %c0_i32, %arg0 : i32, i32
  }
  func.func @transform_2(%arg0: i32) -> (i32, i32) {
    %c0_i32 = arith.constant 0 : i32
    %c0_i32_0 = arith.constant 0 : i32
    return %c0_i32, %arg0 : i32, i32
  }
  func.func @transform_3(%arg0: i32) -> (i32, i32) {
    %c0_i32 = arith.constant 0 : i32
    %c0_i32_0 = arith.constant 0 : i32
    return %c0_i32, %arg0 : i32, i32
  }
}

</mosaic_0001>

<llo_original>
// kernel: tpu_custom_call.1
$region0: #{tpu_custom_call.1}
  #allocation0 [shape = 'u32[]', space=smem, size = 0x4, offset = 0x4, fixed_abs, tag = 'smem constant byte address 0x4 - core index']
  #allocation1 [shape = 'u32[72,128]{1,0:T(1,128)}', space=vmem, size = 0x9000, scoped, tag = 'internal scratch']
  %s0 = inlined_call_operand.hbm [shape: f32[8,32], index: 0, kind: input, shape index: {}]
  %s1 = inlined_call_operand.hbm [shape: f32[1,32], index: 1, kind: input, shape index: {}]
  %s2 = inlined_call_operand.vmem [shape: f32[1,32], index: 2, kind: input, shape index: {}]
  %s3 = inlined_call_operand.hbm [shape: f32[8,32], index: 3, kind: output, shape index: {}]
  %s4 = sld [smem:[#allocation0]]
  $region30: #{tpu_custom_call.1} parent=0
    _
  %s6 = ssub.s32 1, %s4
  %s7 = scalar_select 0, %s6, %s4
  $region1: #{tpu_custom_call.1} parent=0
    #allocation2 [shape = 'u8[4096]{0}', space=vmem, size = 0x1000, scoped, tag = 'input window, operand 0, single buffered']
    #allocation3 [shape = 's32[1]{0}', space=sflag, size = 0x4, scoped, tag = 'scoped memory for tpu_custom_call.1']
    #allocation4 [shape = 's32[1]{0}', space=sflag, size = 0x4, scoped, tag = 'scoped memory for tpu_custom_call.1']
    #allocation5 [shape = 'u8[512]{0}', space=vmem, size = 0x400, scoped, tag = 'input window, operand 1, single buffered']
    #allocation6 [shape = 's32[1]{0}', space=sflag, size = 0x4, scoped, tag = 'scoped memory for tpu_custom_call.1']
    #allocation7 [shape = 'u8[4096]{0}', space=vmem, size = 0x1000, scoped, tag = 'output window, operand 0, single buffered']
    %8 = vsyncpa [#allocation3], 0
    %9 = vsyncpa [#allocation6], 0
    %10 = vsyncpa [#allocation4], 0
    // Predicated region
    $region2: #{tpu_custom_call.1} parent=1 // pred_check
      _
    $region3: #{tpu_custom_call.1} parent=1 // pred_check_branch
      %12 = sbr.rel (0) target = $region5
    $region4: #{tpu_custom_call.1} parent=1 // pred_region
      %14 = vsyncadd [#allocation3], 0
      %s16 = sshll.u32 %s0, 4
      %s17 = int_to_ptr.hbm [resolvable:$true] %s16
      %s18 = sshll.u32 [#allocation2], 4
      %s19 = int_to_ptr.vmem [resolvable:$true] %s18
      %21 = dma.hbm_to_vmem [thread:$0]  %s17, 128, %s19, [#allocation3]
    $region5: #{tpu_custom_call.1} parent=1 // pred_fallthru
      _
    // Predicated region
    $region6: #{tpu_custom_call.1} parent=1 // pred_check
      _
    $region7: #{tpu_custom_call.1} parent=1 // pred_check_branch
      %23 = sbr.rel (0) target = $region9
    $region8: #{tpu_custom_call.1} parent=1 // pred_region
      %25 = vsyncadd [#allocation6], 0
      %s27 = sshll.u32 %s1, 4
      %s28 = int_to_ptr.hbm [resolvable:$true] %s27
      %s29 = sshll.u32 [#allocation5], 4
      %s30 = int_to_ptr.vmem [resolvable:$true] %s29
      %32 = dma.hbm_to_vmem [thread:$0]  %s28, 16, %s30, [#allocation6]
    $region9: #{tpu_custom_call.1} parent=1 // pred_fallthru
      _
    // Predicated region
    $region10: #{tpu_custom_call.1} parent=1 // pred_check
      _
    $region11: #{tpu_custom_call.1} parent=1 // pred_check_branch
      %34 = sbr.rel (0) target = $region13
    $region12: #{tpu_custom_call.1} parent=1 // pred_region
      _
    $region13: #{tpu_custom_call.1} parent=1 // pred_fallthru
      _
    // Predicated region
    $region14: #{tpu_custom_call.1} parent=1 // pred_check
      _
    $region15: #{tpu_custom_call.1} parent=1 // pred_check_branch
      %36 = sbr.rel (0) target = $region17
    $region16: #{tpu_custom_call.1} parent=1 // pred_region
      %38 = dma.done [#allocation3], 128
    $region17: #{tpu_custom_call.1} parent=1 // pred_fallthru
      _
    // Predicated region
    $region18: #{tpu_custom_call.1} parent=1 // pred_check
      _
    $region19: #{tpu_custom_call.1} parent=1 // pred_check_branch
      %40 = sbr.rel (0) target = $region21
    $region20: #{tpu_custom_call.1} parent=1 // pred_region
      %42 = dma.done [#allocation6], 16
    $region21: #{tpu_custom_call.1} parent=1 // pred_fallthru
      _
    %v43 = vld [vmem:[#allocation2] sm:$0xff]
    %vm44 = vcmask 261120
    %v45 = vsel %vm44, %v43, 0.0
    %v46 = vrot.slane %v45, 4
    %v47 = vadd.f32 %v45, %v46
    %v48 = vrot.slane %v47, 2
    %v49 = vadd.f32 %v47, %v48
    %v50 = vrot.slane %v49, 1
    %v51 = vadd.f32 %v49, %v50
    %v52 = vmul.f32 %v43, %v43
    %v53 = vsel %vm44, %v52, 0.0
    %v54 = vrot.slane %v53, 4
    %v55 = vadd.f32 %v53, %v54
    %v56 = vrot.slane %v55, 2
    %v57 = vadd.f32 %v55, %v56
    %v58 = vrot.slane %v57, 1
    %v59 = vadd.f32 %v57, %v58
    %v60 = vmul.f32 %v51, 0.125
    %v61 = vmul.f32 %v59, 0.125
    %v62 = vmul.f32 %v60, %v60
    %v63 = vsub.f32 %v61, %v62
    %v64 = vmax.f32 %v63, 0.0
    %v65 = vadd.f32 %v64, 1e-05
    %v66 = vrsqrt.pop %v65
    %v67 = vmul.f32 %v66, %v65
    %v68 = vmul.f32 %v67, %v66
    %v69 = vmul.f32 0.5, %v68
    %v70 = vsub.f32 1.5, %v69
    %v71 = vmul.f32 %v66, %v70
    %vm72 = vweird.f32 %v65
    %vm73 = vweird.f32 %v66
    %vm74 = vmor %vm72, %vm73
    %v75 = vsel %vm74, %v66, %v71
    %v76 = vld [vmem:[#allocation5] sm:$0x1]
    %v77 = vmul.f32 %v76, %v75
    %v78 = vld [vmem:[%s2] sm:$0x1]
    %v79 = vmul.f32 %v60, %v77
    %v80 = vsub.f32 %v78, %v79
    %v82 = vperm.slane %v77, 0
    %v84 = vmul.f32 %v43, %v82
    %v86 = vperm.slane %v80, 0
    %v88 = vadd.f32 %v84, %v86
    %89 = vst.msk [vmem:[#allocation7] sm:$0xff] %vm44, %v88
    // Predicated region
    $region22: #{tpu_custom_call.1} parent=1 // pred_check
      _
    $region23: #{tpu_custom_call.1} parent=1 // pred_check_branch
      %91 = sbr.rel (0) target = $region25
    $region24: #{tpu_custom_call.1} parent=1 // pred_region
      %93 = vsyncadd [#allocation4], 0
      %s95 = sshll.u32 [#allocation7], 4
      %s96 = int_to_ptr.vmem [resolvable:$true] %s95
      %s97 = sshll.u32 %s3, 4
      %s98 = int_to_ptr.hbm [resolvable:$true] %s97
      %100 = dma.vmem_to_hbm [thread:$0]  %s96, 128, %s98, [#allocation4]
    $region25: #{tpu_custom_call.1} parent=1 // pred_fallthru
      _
    // Predicated region
    $region26: #{tpu_custom_call.1} parent=1 // pred_check
      _
    $region27: #{tpu_custom_call.1} parent=1 // pred_check_branch
      %102 = sbr.rel (0) target = $region29
    $region28: #{tpu_custom_call.1} parent=1 // pred_region
      %104 = dma.done [#allocation4], 128
    $region29: #{tpu_custom_call.1} parent=1 // pred_fallthru
      _
    %105 = vsyncpa [#allocation3], 1
    %106 = vsyncpa [#allocation6], 1
    %107 = vsyncpa [#allocation4], 1

</llo_original>
